<compile_context>
chip_gen: v7x
topology: tpu7x:2x2x1
jax: 0.10.0
libtpu: 0.0.40
codegen_flags: <defaults>
</compile_context>

<pallas_src>
import jax
import jax.numpy as jnp
from jax.experimental import pallas as pl
from jax.experimental.pallas import tpu as pltpu


def _epic_doc_quality_kernel(x_ref, w_ref, b_ref, o_ref):
    # x_ref: (TB, D)  input tile (rows on sublanes, features on lanes)
    # w_ref: (1, D)   linear weight (out_features == 1), resident across steps
    # b_ref: (1,)     bias scalar in SMEM
    # o_ref: (1, TB)  lane-dense output row: sigmoid(w @ x^T + b)
    logits = jax.lax.dot_general(
        w_ref[...], x_ref[...],
        dimension_numbers=(((1,), (1,)), ((), ())),   # contract over D -> (1, TB)
        preferred_element_type=jnp.float32,
        precision=jax.lax.Precision.HIGHEST,
    )
    o_ref[...] = jax.nn.sigmoid(logits + b_ref[0]).astype(o_ref.dtype)


def _pick_block_b(batch, dim, itemsize, vmem_budget_bytes=8 << 20):
    """Rows per tile: large enough to amortize per-step overhead (~0.35us),
    small enough that the double-buffered x tile stays well under v7x VMEM."""
    bytes_per_row = max(1, dim * itemsize)
    max_rows = max(128, vmem_budget_bytes // (2 * bytes_per_row))
    block_b = min(1024, max_rows)
    block_b = max(128, (block_b // 128) * 128)          # keep output lane-dense
    # Don't pick a tile larger than the (128-rounded) batch itself.
    block_b = min(block_b, ((batch + 127) // 128) * 128)
    return int(block_b)


def epic_doc_quality(x, weight, bias, *, block_b=None):
    """Pallas implementation of EPICDocQuality.forward.

    x:      (B, D)
    weight: (1, D)   (matches nn.Linear(dim, 1).weight)
    bias:   (1,)     (matches nn.Linear(dim, 1).bias)
    returns (B, 1)
    """
    B, D = x.shape
    assert weight.shape == (1, D)
    bias1 = bias.reshape(1).astype(jnp.float32)

    if block_b is None:
        block_b = _pick_block_b(B, D, x.dtype.itemsize)
    assert block_b % 128 == 0

    num_blocks = pl.cdiv(B, block_b)
    b_pad = num_blocks * block_b
    x_in = x if b_pad == B else jnp.pad(x, ((0, b_pad - B), (0, 0)))

    out_row = pl.pallas_call(
        _epic_doc_quality_kernel,
        out_shape=jax.ShapeDtypeStruct((1, b_pad), x.dtype),
        grid_spec=pltpu.PrefetchScalarGridSpec(
            num_scalar_prefetch=0,
            grid=(num_blocks,),
            in_specs=[
                pl.BlockSpec((block_b, D), lambda i: (i, 0)),        # x tile
                pl.BlockSpec((1, D), lambda i: (0, 0)),              # weight (resident)
                pl.BlockSpec(memory_space=pltpu.MemorySpace.SMEM),   # bias scalar
            ],
            out_specs=pl.BlockSpec((1, block_b), lambda i: (0, i)),  # lane-dense
        ),
        compiler_params=pltpu.CompilerParams(
            dimension_semantics=("parallel",),
            vmem_limit_bytes=32 * 1024 * 1024,
        ),
    )(x_in, weight, bias1)

    return out_row[0, :B].reshape(B, 1)


if __name__ == "__main__":
    # Small, deterministic setup consistent with the module: dim=32, batch=8.
    dim = 32
    batch = 8

    key = jax.random.PRNGKey(0)
    kx, kw, kb = jax.random.split(key, 3)

    x = jax.random.normal(kx, (batch, dim), dtype=jnp.float32)
    # nn.Linear(dim, 1) parameters, deterministically initialized in-script.
    weight = jax.random.uniform(kw, (1, dim), dtype=jnp.float32,
                                minval=-1.0 / jnp.sqrt(dim),
                                maxval=1.0 / jnp.sqrt(dim))
    bias = jax.random.uniform(kb, (1,), dtype=jnp.float32,
                              minval=-1.0 / jnp.sqrt(dim),
                              maxval=1.0 / jnp.sqrt(dim))

    out = epic_doc_quality(x, weight, bias)
    out = jax.block_until_ready(out)

    # Reference: exact f32 per-row dot (same semantics as the PyTorch module).
    ref = jax.nn.sigmoid(jnp.sum(x * weight, axis=-1, keepdims=True) + bias)
    assert out.shape == (batch, 1)
    assert jnp.allclose(out, ref, atol=1e-4, rtol=1e-4)

    print("KERNEL_OK")
</pallas_src>

<mosaic_0001>
module attributes {stable_mosaic.version = 11 : i64} {
  func.func @_epic_doc_quality_kernel(%arg0: i32, %arg1: memref<128x32xf32, #tpu.memory_space<vmem>>, %arg2: memref<1x32xf32, #tpu.memory_space<vmem>>, %arg3: memref<1xf32, #tpu.memory_space<smem>>, %arg4: memref<1x128xf32, #tpu.memory_space<vmem>>) attributes {dimension_semantics = [#tpu.dimension_semantics<parallel>], iteration_bounds = array<i64: 1>, scalar_prefetch = 0 : i64, scratch_operands = 0 : i64, tpu.core_type = #tpu.core_type<tc>, window_params = [{transform_indices = @transform_0, window_bounds = array<i64: 128, 32>}, {pipeline_mode = #tpu.pipeline_mode<synchronous>, transform_indices = @transform_1, window_bounds = array<i64: 1, 32>}, {transform_indices = @transform_2, window_bounds = array<i64: 1>}, {transform_indices = @transform_3, window_bounds = array<i64: 1, 128>}]} {
    %c0 = arith.constant 0 : index
    %c0_0 = arith.constant 0 : index
    %0 = vector.load %arg2[%c0, %c0_0] : memref<1x32xf32, #tpu.memory_space<vmem>>, vector<1x32xf32>
    %c0_1 = arith.constant 0 : index
    %c0_2 = arith.constant 0 : index
    %1 = vector.load %arg1[%c0_1, %c0_2] : memref<128x32xf32, #tpu.memory_space<vmem>>, vector<128x32xf32>
    %cst = arith.constant dense<0.000000e+00> : vector<1x128xf32>
    %2 = tpu.matmul %0, %1, %cst {dimension_numbers = #tpu.dot_dimension_numbers<[1], [1], [0], [0], [0, 0, 1, 0], [], []>, precision = #tpu.contract_precision<fp32>} : vector<1x32xf32>, vector<128x32xf32>, vector<1x128xf32> -> vector<1x128xf32>
    %c0_3 = arith.constant 0 : index
    %3 = memref.load %arg3[%c0_3] : memref<1xf32, #tpu.memory_space<smem>>
    %4 = vector.broadcast %3 : f32 to vector<1x128xf32>
    %5 = arith.addf %2, %4 : vector<1x128xf32>
    %6 = arith.negf %5 : vector<1x128xf32>
    %7 = math.exp %6 : vector<1x128xf32>
    %cst_4 = arith.constant 1.000000e+00 : f32
    %8 = vector.broadcast %cst_4 : f32 to vector<1x128xf32>
    %9 = arith.addf %8, %7 : vector<1x128xf32>
    %10 = arith.divf %8, %9 : vector<1x128xf32>
    %c0_5 = arith.constant 0 : index
    %c0_6 = arith.constant 0 : index
    %11 = vector.load %arg4[%c0_5, %c0_6] : memref<1x128xf32, #tpu.memory_space<vmem>>, vector<1x128xf32>
    tpu.vector_store %arg4[%c0_5, %c0_6], %10 {strides = array<i32>} : memref<1x128xf32, #tpu.memory_space<vmem>>, vector<1x128xf32>,
    return
  }
  func.func @transform_0(%arg0: i32) -> (i32, i32) {
    %c0_i32 = arith.constant 0 : i32
    %c0_i32_0 = arith.constant 0 : i32
    return %arg0, %c0_i32 : i32, i32
  }
  func.func @transform_1(%arg0: i32) -> (i32, i32) {
    %c0_i32 = arith.constant 0 : i32
    %c0_i32_0 = arith.constant 0 : i32
    %c0_i32_1 = arith.constant 0 : i32
    return %c0_i32, %c0_i32_0 : i32, i32
  }
  func.func @transform_2(%arg0: i32) -> i32 {
    %c0_i32 = arith.constant 0 : i32
    %c0_i32_0 = arith.constant 0 : i32
    return %c0_i32 : i32
  }
  func.func @transform_3(%arg0: i32) -> (i32, i32) {
    %c0_i32 = arith.constant 0 : i32
    %c0_i32_0 = arith.constant 0 : i32
    return %c0_i32, %arg0 : i32, i32
  }
}

</mosaic_0001>

<llo_original>
// kernel: tpu_custom_call.1
$region0: #{tpu_custom_call.1}
  #allocation0 [shape = 'u32[]', space=smem, size = 0x4, offset = 0x4, fixed_abs, tag = 'smem constant byte address 0x4 - core index']
  #allocation1 [shape = 'u32[144,128]{1,0:T(1,128)}', space=vmem, size = 0x12000, scoped, tag = 'internal scratch']
  #allocation2 [shape = 'f32[1]{0:T(128)S(6)}', space=smem, size = 0x200, scoped, tag = 'scoped memory for tpu_custom_call.1']
  %s0 = inlined_call_operand.vmem [shape: f32[128,32], index: 0, kind: input, shape index: {}]
  %s1 = inlined_call_operand.vmem [shape: f32[1,32], index: 1, kind: input, shape index: {}]
  %s2 = inlined_call_operand.<no memory space> [shape: f32[1], index: 2, kind: input, shape index: {}]
  %s3 = inlined_call_operand.hbm [shape: f32[1,128], index: 3, kind: output, shape index: {}]
  %s4 = sld [smem:[#allocation0]]
  $region22: #{tpu_custom_call.1} parent=0
    _
  %s6 = ssub.s32 1, %s4
  %s7 = scalar_select 0, %s6, %s4
  %8 = sst [smem:[#allocation2]] %s2
  $region1: #{tpu_custom_call.1} parent=0
    #allocation3 [shape = 'u8[512]{0}', space=vmem, size = 0x400, scoped, tag = 'output window, operand 0, single buffered']
    #allocation4 [shape = 's32[1]{0}', space=sflag, size = 0x4, scoped, tag = 'scoped memory for tpu_custom_call.1']
    %9 = vsyncpa [#allocation4], 0
    // Predicated region
    $region2: #{tpu_custom_call.1} parent=1 // pred_check
      _
    $region3: #{tpu_custom_call.1} parent=1 // pred_check_branch
      %11 = sbr.rel (0) target = $region5
    $region4: #{tpu_custom_call.1} parent=1 // pred_region
      _
    $region5: #{tpu_custom_call.1} parent=1 // pred_fallthru
      _
    // Predicated region
    $region6: #{tpu_custom_call.1} parent=1 // pred_check
      _
    $region7: #{tpu_custom_call.1} parent=1 // pred_check_branch
      %13 = sbr.rel (0) target = $region9
    $region8: #{tpu_custom_call.1} parent=1 // pred_region
      _
    $region9: #{tpu_custom_call.1} parent=1 // pred_fallthru
      _
    // Predicated region
    $region10: #{tpu_custom_call.1} parent=1 // pred_check
      _
    $region11: #{tpu_custom_call.1} parent=1 // pred_check_branch
      %15 = sbr.rel (0) target = $region13
    $region12: #{tpu_custom_call.1} parent=1 // pred_region
      _
    $region13: #{tpu_custom_call.1} parent=1 // pred_fallthru
      _
    %v16 = vld [vmem:[%s1] sm:$0x1]
    %v17 = vld [vmem:[%s0] sm:$0xff]
    %v18 = vld [vmem:[%s0 + $0x8] sm:$0xff]
    %v19 = vld [vmem:[%s0 + $0x10] sm:$0xff]
    %v20 = vld [vmem:[%s0 + $0x18] sm:$0xff]
    %v21 = vld [vmem:[%s0 + $0x20] sm:$0xff]
    %v22 = vld [vmem:[%s0 + $0x28] sm:$0xff]
    %v23 = vld [vmem:[%s0 + $0x30] sm:$0xff]
    %v24 = vld [vmem:[%s0 + $0x38] sm:$0xff]
    %v25 = vld [vmem:[%s0 + $0x40] sm:$0xff]
    %v26 = vld [vmem:[%s0 + $0x48] sm:$0xff]
    %v27 = vld [vmem:[%s0 + $0x50] sm:$0xff]
    %v28 = vld [vmem:[%s0 + $0x58] sm:$0xff]
    %v29 = vld [vmem:[%s0 + $0x60] sm:$0xff]
    %v30 = vld [vmem:[%s0 + $0x68] sm:$0xff]
    %v31 = vld [vmem:[%s0 + $0x70] sm:$0xff]
    %v32 = vld [vmem:[%s0 + $0x78] sm:$0xff]
    %s33 = sld [smem:[#allocation2]]
    %v34 = vstv %s33
    %vm35 = vcmask 261120
    %v37 = vsel %vm35, %v16, 0
    %v40 = vsel %vm35, %v17, 0
    %v43 = vsel %vm35, %v18, 0
    %v46 = vsel %vm35, %v19, 0
    %v49 = vsel %vm35, %v20, 0
    %v52 = vsel %vm35, %v21, 0
    %v55 = vsel %vm35, %v22, 0
    %v58 = vsel %vm35, %v23, 0
    %v61 = vsel %vm35, %v24, 0
    %v64 = vsel %vm35, %v25, 0
    %v67 = vsel %vm35, %v26, 0
    %v70 = vsel %vm35, %v27, 0
    %v73 = vsel %vm35, %v28, 0
    %v76 = vsel %vm35, %v29, 0
    %v79 = vsel %vm35, %v30, 0
    %v82 = vsel %vm35, %v31, 0
    %v85 = vsel %vm35, %v32, 0
    %87 = vmatprep.subr.mxu0 0.0
    %v88 = vand.u32 %v40, 4294901760
    %89 = vmatpush1.xpose.msra.mxu0 %v88
    %90 = vmatprep.subr.mxu0 0.0
    %v91 = vand.u32 %v43, 4294901760
    %92 = vmatpush1.xpose.msra.mxu0 %v91
    %93 = vmatprep.subr.mxu0 0.0
    %v94 = vand.u32 %v46, 4294901760
    %95 = vmatpush1.xpose.msra.mxu0 %v94
    %96 = vmatprep.subr.mxu0 0.0
    %v97 = vand.u32 %v49, 4294901760
    %98 = vmatpush1.xpose.msra.mxu0 %v97
    %99 = vmatprep.subr.mxu0 0.0
    %v100 = vand.u32 %v52, 4294901760
    %101 = vmatpush1.xpose.msra.mxu0 %v100
    %102 = vmatprep.subr.mxu0 0.0
    %v103 = vand.u32 %v55, 4294901760
    %104 = vmatpush1.xpose.msra.mxu0 %v103
    %105 = vmatprep.subr.mxu0 0.0
    %v106 = vand.u32 %v58, 4294901760
    %107 = vmatpush1.xpose.msra.mxu0 %v106
    %108 = vmatprep.subr.mxu0 0.0
    %v109 = vand.u32 %v61, 4294901760
    %110 = vmatpush1.xpose.msra.mxu0 %v109
    %111 = vmatprep.subr.mxu0 0.0
    %v112 = vand.u32 %v64, 4294901760
    %113 = vmatpush1.xpose.msra.mxu0 %v112
    %114 = vmatprep.subr.mxu0 0.0
    %v115 = vand.u32 %v67, 4294901760
    %116 = vmatpush1.xpose.msra.mxu0 %v115
    %117 = vmatprep.subr.mxu0 0.0
    %v118 = vand.u32 %v70, 4294901760
    %119 = vmatpush1.xpose.msra.mxu0 %v118
    %120 = vmatprep.subr.mxu0 0.0
    %v121 = vand.u32 %v73, 4294901760
    %122 = vmatpush1.xpose.msra.mxu0 %v121
    %123 = vmatprep.subr.mxu0 0.0
    %v124 = vand.u32 %v76, 4294901760
    %125 = vmatpush1.xpose.msra.mxu0 %v124
    %126 = vmatprep.subr.mxu0 0.0
    %v127 = vand.u32 %v79, 4294901760
    %128 = vmatpush1.xpose.msra.mxu0 %v127
    %129 = vmatprep.subr.mxu0 0.0
    %v130 = vand.u32 %v82, 4294901760
    %131 = vmatpush1.xpose.msra.mxu0 %v130
    %132 = vmatprep.subr.mxu0 0.0
    %v133 = vand.u32 %v85, 4294901760
    %134 = vmatpush1.xpose.msra.mxu0 %v133
    %135 = vmatprep.subr.mxu0 0.0
    %136 = vmatpush1.xpose.msra.mxu0 0.0
    %137 = vmatprep.subr.mxu0 0.0
    %138 = vmatpush1.xpose.msra.mxu0 0.0
    %139 = vmatprep.subr.mxu0 0.0
    %140 = vmatpush1.xpose.msra.mxu0 0.0
    %141 = vmatprep.subr.mxu0 0.0
    %142 = vmatpush1.xpose.msra.mxu0 0.0
    %143 = vmatprep.subr.mxu0 0.0
    %144 = vmatpush1.xpose.msra.mxu0 0.0
    %145 = vmatprep.subr.mxu0 0.0
    %146 = vmatpush1.xpose.msra.mxu0 0.0
    %147 = vmatprep.subr.mxu0 0.0
    %148 = vmatpush1.xpose.msra.mxu0 0.0
    %149 = vmatprep.subr.mxu0 0.0
    %150 = vmatpush1.xpose.msra.mxu0 0.0
    %151 = vmatprep.subr.mxu0 0.0
    %152 = vmatpush1.xpose.msra.mxu0 0.0
    %153 = vmatprep.subr.mxu0 0.0
    %154 = vmatpush1.xpose.msra.mxu0 0.0
    %155 = vmatprep.subr.mxu0 0.0
    %156 = vmatpush1.xpose.msra.mxu0 0.0
    %157 = vmatprep.subr.mxu0 0.0
    %158 = vmatpush1.xpose.msra.mxu0 0.0
    %159 = vmatprep.subr.mxu0 0.0
    %160 = vmatpush1.xpose.msra.mxu0 0.0
    %161 = vmatprep.subr.mxu0 0.0
    %162 = vmatpush1.xpose.msra.mxu0 0.0
    %163 = vmatprep.subr.mxu0 0.0
    %164 = vmatpush1.xpose.msra.mxu0 0.0
    %165 = vmatprep.subr.mxu0 0.0
    %166 = vmatpush1.xpose.msra.mxu0 0.0
    %167 = vmatprep.mubr.f32.mxu0 0.0
    %v168 = vand.u32 %v37, 4294901760
    %v169 = vsub.f32 %v37, %v168
    %v170 = vand.u32 %v169, 4294901760
    %v171 = vsub.f32 %v169, %v170
    %v172 = vand.u32 %v171, 4294901760
    %173 = vmatmul.mubr.f32.gmra.mrb[0].mxu0 %v172
    %v174 = vpop.f32.mrb[0].mxu0
    %v175 = vadd.f32 %v34, %v174
    %v176 = vpop.f32.mrb[0].mxu0
    %177 = vdwg.mxu0
    %178 = vmatprep.subr.mxu0 0.0
    %v179 = vand.u32 %v40, 4294901760
    %v180 = vsub.f32 %v40, %v179
    %v181 = vand.u32 %v180, 4294901760
    %v182 = vsub.f32 %v180, %v181
    %v183 = vand.u32 %v182, 4294901760
    %184 = vmatpush1.xpose.msra.mxu0 %v183
    %185 = vmatprep.subr.mxu0 0.0
    %v186 = vand.u32 %v43, 4294901760
    %v187 = vsub.f32 %v43, %v186
    %v188 = vand.u32 %v187, 4294901760
    %v189 = vsub.f32 %v187, %v188
    %v190 = vand.u32 %v189, 4294901760
    %191 = vmatpush1.xpose.msra.mxu0 %v190
    %192 = vmatprep.subr.mxu0 0.0
    %v193 = vand.u32 %v46, 4294901760
    %v194 = vsub.f32 %v46, %v193
    %v195 = vand.u32 %v194, 4294901760
    %v196 = vsub.f32 %v194, %v195
    %v197 = vand.u32 %v196, 4294901760
    %198 = vmatpush1.xpose.msra.mxu0 %v197
    %199 = vmatprep.subr.mxu0 0.0
    %v200 = vand.u32 %v49, 4294901760
    %v201 = vsub.f32 %v49, %v200
    %v202 = vand.u32 %v201, 4294901760
    %v203 = vsub.f32 %v201, %v202
    %v204 = vand.u32 %v203, 4294901760
    %205 = vmatpush1.xpose.msra.mxu0 %v204
    %206 = vmatprep.subr.mxu0 0.0
    %v207 = vand.u32 %v52, 4294901760
    %v208 = vsub.f32 %v52, %v207
    %v209 = vand.u32 %v208, 4294901760
    %v210 = vsub.f32 %v208, %v209
    %v211 = vand.u32 %v210, 4294901760
    %212 = vmatpush1.xpose.msra.mxu0 %v211
    %213 = vmatprep.subr.mxu0 0.0
    %v214 = vand.u32 %v55, 4294901760
    %v215 = vsub.f32 %v55, %v214
    %v216 = vand.u32 %v215, 4294901760
    %v217 = vsub.f32 %v215, %v216
    %v218 = vand.u32 %v217, 4294901760
    %219 = vmatpush1.xpose.msra.mxu0 %v218
    %220 = vmatprep.subr.mxu0 0.0
    %v221 = vand.u32 %v58, 4294901760
    %v222 = vsub.f32 %v58, %v221
    %v223 = vand.u32 %v222, 4294901760
    %v224 = vsub.f32 %v222, %v223
    %v225 = vand.u32 %v224, 4294901760
    %226 = vmatpush1.xpose.msra.mxu0 %v225
    %227 = vmatprep.subr.mxu0 0.0
    %v228 = vand.u32 %v61, 4294901760
    %v229 = vsub.f32 %v61, %v228
    %v230 = vand.u32 %v229, 4294901760
    %v231 = vsub.f32 %v229, %v230
    %v232 = vand.u32 %v231, 4294901760
    %233 = vmatpush1.xpose.msra.mxu0 %v232
    %234 = vmatprep.subr.mxu0 0.0
    %v235 = vand.u32 %v64, 4294901760
    %v236 = vsub.f32 %v64, %v235
    %v237 = vand.u32 %v236, 4294901760
    %v238 = vsub.f32 %v236, %v237
    %v239 = vand.u32 %v238, 4294901760
    %240 = vmatpush1.xpose.msra.mxu0 %v239
    %241 = vmatprep.subr.mxu0 0.0
    %v242 = vand.u32 %v67, 4294901760
    %v243 = vsub.f32 %v67, %v242
    %v244 = vand.u32 %v243, 4294901760
    %v245 = vsub.f32 %v243, %v244
    %v246 = vand.u32 %v245, 4294901760
    %247 = vmatpush1.xpose.msra.mxu0 %v246
    %248 = vmatprep.subr.mxu0 0.0
    %v249 = vand.u32 %v70, 4294901760
    %v250 = vsub.f32 %v70, %v249
    %v251 = vand.u32 %v250, 4294901760
    %v252 = vsub.f32 %v250, %v251
    %v253 = vand.u32 %v252, 4294901760
    %254 = vmatpush1.xpose.msra.mxu0 %v253
    %255 = vmatprep.subr.mxu0 0.0
    %v256 = vand.u32 %v73, 4294901760
    %v257 = vsub.f32 %v73, %v256
    %v258 = vand.u32 %v257, 4294901760
    %v259 = vsub.f32 %v257, %v258
    %v260 = vand.u32 %v259, 4294901760
    %261 = vmatpush1.xpose.msra.mxu0 %v260
    %262 = vmatprep.subr.mxu0 0.0
    %v263 = vand.u32 %v76, 4294901760
    %v264 = vsub.f32 %v76, %v263
    %v265 = vand.u32 %v264, 4294901760
    %v266 = vsub.f32 %v264, %v265
    %v267 = vand.u32 %v266, 4294901760
    %268 = vmatpush1.xpose.msra.mxu0 %v267
    %269 = vmatprep.subr.mxu0 0.0
    %v270 = vand.u32 %v79, 4294901760
    %v271 = vsub.f32 %v79, %v270
    %v272 = vand.u32 %v271, 4294901760
    %v273 = vsub.f32 %v271, %v272
    %v274 = vand.u32 %v273, 4294901760
    %275 = vmatpush1.xpose.msra.mxu0 %v274
    %276 = vmatprep.subr.mxu0 0.0
    %v277 = vand.u32 %v82, 4294901760
    %v278 = vsub.f32 %v82, %v277
    %v279 = vand.u32 %v278, 4294901760
    %v280 = vsub.f32 %v278, %v279
    %v281 = vand.u32 %v280, 4294901760
    %282 = vmatpush1.xpose.msra.mxu0 %v281
    %283 = vmatprep.subr.mxu0 0.0
    %v284 = vand.u32 %v85, 4294901760
    %v285 = vsub.f32 %v85, %v284
    %v286 = vand.u32 %v285, 4294901760
    %v287 = vsub.f32 %v285, %v286
    %v288 = vand.u32 %v287, 4294901760
    %289 = vmatpush1.xpose.msra.mxu0 %v288
    %290 = vmatprep.subr.mxu0 0.0
    %291 = vmatpush1.xpose.msra.mxu0 0.0
    %292 = vmatprep.subr.mxu0 0.0
    %293 = vmatpush1.xpose.msra.mxu0 0.0
    %294 = vmatprep.subr.mxu0 0.0
    %295 = vmatpush1.xpose.msra.mxu0 0.0
    %296 = vmatprep.subr.mxu0 0.0
    %297 = vmatpush1.xpose.msra.mxu0 0.0
    %298 = vmatprep.subr.mxu0 0.0
    %299 = vmatpush1.xpose.msra.mxu0 0.0
    %300 = vmatprep.subr.mxu0 0.0
    %301 = vmatpush1.xpose.msra.mxu0 0.0
    %302 = vmatprep.subr.mxu0 0.0
    %303 = vmatpush1.xpose.msra.mxu0 0.0
    %304 = vmatprep.subr.mxu0 0.0
    %305 = vmatpush1.xpose.msra.mxu0 0.0
    %306 = vmatprep.subr.mxu0 0.0
    %307 = vmatpush1.xpose.msra.mxu0 0.0
    %308 = vmatprep.subr.mxu0 0.0
    %309 = vmatpush1.xpose.msra.mxu0 0.0
    %310 = vmatprep.subr.mxu0 0.0
    %311 = vmatpush1.xpose.msra.mxu0 0.0
    %312 = vmatprep.subr.mxu0 0.0
    %313 = vmatpush1.xpose.msra.mxu0 0.0
    %314 = vmatprep.subr.mxu0 0.0
    %315 = vmatpush1.xpose.msra.mxu0 0.0
    %316 = vmatprep.subr.mxu0 0.0
    %317 = vmatpush1.xpose.msra.mxu0 0.0
    %318 = vmatprep.subr.mxu0 0.0
    %319 = vmatpush1.xpose.msra.mxu0 0.0
    %320 = vmatprep.subr.mxu0 0.0
    %321 = vmatpush1.xpose.msra.mxu0 0.0
    %322 = vmatprep.mubr.f32.mxu0 0.0
    %v323 = vand.u32 %v37, 4294901760
    %324 = vmatmul.mubr.f32.gmra.mrb[0].mxu0 %v323
    %v325 = vpop.f32.mrb[0].mxu0
    %v326 = vadd.f32 %v175, %v325
    %v327 = vpop.f32.mrb[0].mxu0
    %328 = vdwg.mxu0
    %329 = vmatprep.subr.mxu0 0.0
    %v330 = vand.u32 %v40, 4294901760
    %v331 = vsub.f32 %v40, %v330
    %332 = vmatpush1.xpose.msra.mxu0 %v331
    %333 = vmatprep.subr.mxu0 0.0
    %v334 = vand.u32 %v43, 4294901760
    %v335 = vsub.f32 %v43, %v334
    %336 = vmatpush1.xpose.msra.mxu0 %v335
    %337 = vmatprep.subr.mxu0 0.0
    %v338 = vand.u32 %v46, 4294901760
    %v339 = vsub.f32 %v46, %v338
    %340 = vmatpush1.xpose.msra.mxu0 %v339
    %341 = vmatprep.subr.mxu0 0.0
    %v342 = vand.u32 %v49, 4294901760
    %v343 = vsub.f32 %v49, %v342
    %344 = vmatpush1.xpose.msra.mxu0 %v343
    %345 = vmatprep.subr.mxu0 0.0
    %v346 = vand.u32 %v52, 4294901760
    %v347 = vsub.f32 %v52, %v346
    %348 = vmatpush1.xpose.msra.mxu0 %v347
    %349 = vmatprep.subr.mxu0 0.0
    %v350 = vand.u32 %v55, 4294901760
    %v351 = vsub.f32 %v55, %v350
    %352 = vmatpush1.xpose.msra.mxu0 %v351
    %353 = vmatprep.subr.mxu0 0.0
    %v354 = vand.u32 %v58, 4294901760
    %v355 = vsub.f32 %v58, %v354
    %356 = vmatpush1.xpose.msra.mxu0 %v355
    %357 = vmatprep.subr.mxu0 0.0
    %v358 = vand.u32 %v61, 4294901760
    %v359 = vsub.f32 %v61, %v358
    %360 = vmatpush1.xpose.msra.mxu0 %v359
    %361 = vmatprep.subr.mxu0 0.0
    %v362 = vand.u32 %v64, 4294901760
    %v363 = vsub.f32 %v64, %v362
    %364 = vmatpush1.xpose.msra.mxu0 %v363
    %365 = vmatprep.subr.mxu0 0.0
    %v366 = vand.u32 %v67, 4294901760
    %v367 = vsub.f32 %v67, %v366
    %368 = vmatpush1.xpose.msra.mxu0 %v367
    %369 = vmatprep.subr.mxu0 0.0
    %v370 = vand.u32 %v70, 4294901760
    %v371 = vsub.f32 %v70, %v370
    %372 = vmatpush1.xpose.msra.mxu0 %v371
    %373 = vmatprep.subr.mxu0 0.0
    %v374 = vand.u32 %v73, 4294901760
    %v375 = vsub.f32 %v73, %v374
    %376 = vmatpush1.xpose.msra.mxu0 %v375
    %377 = vmatprep.subr.mxu0 0.0
    %v378 = vand.u32 %v76, 4294901760
    %v379 = vsub.f32 %v76, %v378
    %380 = vmatpush1.xpose.msra.mxu0 %v379
    %381 = vmatprep.subr.mxu0 0.0
    %v382 = vand.u32 %v79, 4294901760
    %v383 = vsub.f32 %v79, %v382
    %384 = vmatpush1.xpose.msra.mxu0 %v383
    %385 = vmatprep.subr.mxu0 0.0
    %v386 = vand.u32 %v82, 4294901760
    %v387 = vsub.f32 %v82, %v386
    %388 = vmatpush1.xpose.msra.mxu0 %v387
    %389 = vmatprep.subr.mxu0 0.0
    %v390 = vand.u32 %v85, 4294901760
    %v391 = vsub.f32 %v85, %v390
    %392 = vmatpush1.xpose.msra.mxu0 %v391
    %393 = vmatprep.subr.mxu0 0.0
    %394 = vmatpush1.xpose.msra.mxu0 0.0
    %395 = vmatprep.subr.mxu0 0.0
    %396 = vmatpush1.xpose.msra.mxu0 0.0
    %397 = vmatprep.subr.mxu0 0.0
    %398 = vmatpush1.xpose.msra.mxu0 0.0
    %399 = vmatprep.subr.mxu0 0.0
    %400 = vmatpush1.xpose.msra.mxu0 0.0
    %401 = vmatprep.subr.mxu0 0.0
    %402 = vmatpush1.xpose.msra.mxu0 0.0
    %403 = vmatprep.subr.mxu0 0.0
    %404 = vmatpush1.xpose.msra.mxu0 0.0
    %405 = vmatprep.subr.mxu0 0.0
    %406 = vmatpush1.xpose.msra.mxu0 0.0
    %407 = vmatprep.subr.mxu0 0.0
    %408 = vmatpush1.xpose.msra.mxu0 0.0
    %409 = vmatprep.subr.mxu0 0.0
    %410 = vmatpush1.xpose.msra.mxu0 0.0
    %411 = vmatprep.subr.mxu0 0.0
    %412 = vmatpush1.xpose.msra.mxu0 0.0
    %413 = vmatprep.subr.mxu0 0.0
    %414 = vmatpush1.xpose.msra.mxu0 0.0
    %415 = vmatprep.subr.mxu0 0.0
    %416 = vmatpush1.xpose.msra.mxu0 0.0
    %417 = vmatprep.subr.mxu0 0.0
    %418 = vmatpush1.xpose.msra.mxu0 0.0
    %419 = vmatprep.subr.mxu0 0.0
    %420 = vmatpush1.xpose.msra.mxu0 0.0
    %421 = vmatprep.subr.mxu0 0.0
    %422 = vmatpush1.xpose.msra.mxu0 0.0
    %423 = vmatprep.subr.mxu0 0.0
    %424 = vmatpush1.xpose.msra.mxu0 0.0
    %425 = vmatprep.mubr.f32.mxu0 0.0
    %v426 = vand.u32 %v37, 4294901760
    %v427 = vsub.f32 %v37, %v426
    %428 = vmatmul.mubr.f32.gmra.mrb[0].mxu0 %v427
    %v429 = vpop.f32.mrb[0].mxu0
    %v430 = vadd.f32 %v326, %v429
    %v431 = vpop.f32.mrb[0].mxu0
    %432 = vdwg.mxu0
    %433 = vmatprep.subr.mxu0 0.0
    %v434 = vand.u32 %v40, 4294901760
    %435 = vmatpush1.xpose.msra.mxu0 %v434
    %436 = vmatprep.subr.mxu0 0.0
    %v437 = vand.u32 %v43, 4294901760
    %438 = vmatpush1.xpose.msra.mxu0 %v437
    %439 = vmatprep.subr.mxu0 0.0
    %v440 = vand.u32 %v46, 4294901760
    %441 = vmatpush1.xpose.msra.mxu0 %v440
    %442 = vmatprep.subr.mxu0 0.0
    %v443 = vand.u32 %v49, 4294901760
    %444 = vmatpush1.xpose.msra.mxu0 %v443
    %445 = vmatprep.subr.mxu0 0.0
    %v446 = vand.u32 %v52, 4294901760
    %447 = vmatpush1.xpose.msra.mxu0 %v446
    %448 = vmatprep.subr.mxu0 0.0
    %v449 = vand.u32 %v55, 4294901760
    %450 = vmatpush1.xpose.msra.mxu0 %v449
    %451 = vmatprep.subr.mxu0 0.0
    %v452 = vand.u32 %v58, 4294901760
    %453 = vmatpush1.xpose.msra.mxu0 %v452
    %454 = vmatprep.subr.mxu0 0.0
    %v455 = vand.u32 %v61, 4294901760
    %456 = vmatpush1.xpose.msra.mxu0 %v455
    %457 = vmatprep.subr.mxu0 0.0
    %v458 = vand.u32 %v64, 4294901760
    %459 = vmatpush1.xpose.msra.mxu0 %v458
    %460 = vmatprep.subr.mxu0 0.0
    %v461 = vand.u32 %v67, 4294901760
    %462 = vmatpush1.xpose.msra.mxu0 %v461
    %463 = vmatprep.subr.mxu0 0.0
    %v464 = vand.u32 %v70, 4294901760
    %465 = vmatpush1.xpose.msra.mxu0 %v464
    %466 = vmatprep.subr.mxu0 0.0
    %v467 = vand.u32 %v73, 4294901760
    %468 = vmatpush1.xpose.msra.mxu0 %v467
    %469 = vmatprep.subr.mxu0 0.0
    %v470 = vand.u32 %v76, 4294901760
    %471 = vmatpush1.xpose.msra.mxu0 %v470
    %472 = vmatprep.subr.mxu0 0.0
    %v473 = vand.u32 %v79, 4294901760
    %474 = vmatpush1.xpose.msra.mxu0 %v473
    %475 = vmatprep.subr.mxu0 0.0
    %v476 = vand.u32 %v82, 4294901760
    %477 = vmatpush1.xpose.msra.mxu0 %v476
    %478 = vmatprep.subr.mxu0 0.0
    %v479 = vand.u32 %v85, 4294901760
    %480 = vmatpush1.xpose.msra.mxu0 %v479
    %481 = vmatprep.subr.mxu0 0.0
    %482 = vmatpush1.xpose.msra.mxu0 0.0
    %483 = vmatprep.subr.mxu0 0.0
    %484 = vmatpush1.xpose.msra.mxu0 0.0
    %485 = vmatprep.subr.mxu0 0.0
    %486 = vmatpush1.xpose.msra.mxu0 0.0
    %487 = vmatprep.subr.mxu0 0.0
    %488 = vmatpush1.xpose.msra.mxu0 0.0
    %489 = vmatprep.subr.mxu0 0.0
    %490 = vmatpush1.xpose.msra.mxu0 0.0
    %491 = vmatprep.subr.mxu0 0.0
    %492 = vmatpush1.xpose.msra.mxu0 0.0
    %493 = vmatprep.subr.mxu0 0.0
    %494 = vmatpush1.xpose.msra.mxu0 0.0
    %495 = vmatprep.subr.mxu0 0.0
    %496 = vmatpush1.xpose.msra.mxu0 0.0
    %497 = vmatprep.subr.mxu0 0.0
    %498 = vmatpush1.xpose.msra.mxu0 0.0
    %499 = vmatprep.subr.mxu0 0.0
    %500 = vmatpush1.xpose.msra.mxu0 0.0
    %501 = vmatprep.subr.mxu0 0.0
    %502 = vmatpush1.xpose.msra.mxu0 0.0
    %503 = vmatprep.subr.mxu0 0.0
    %504 = vmatpush1.xpose.msra.mxu0 0.0
    %505 = vmatprep.subr.mxu0 0.0
    %506 = vmatpush1.xpose.msra.mxu0 0.0
    %507 = vmatprep.subr.mxu0 0.0
    %508 = vmatpush1.xpose.msra.mxu0 0.0
    %509 = vmatprep.subr.mxu0 0.0
    %510 = vmatpush1.xpose.msra.mxu0 0.0
    %511 = vmatprep.subr.mxu0 0.0
    %512 = vmatpush1.xpose.msra.mxu0 0.0
    %513 = vmatprep.mubr.f32.mxu0 0.0
    %v514 = vand.u32 %v37, 4294901760
    %v515 = vsub.f32 %v37, %v514
    %v516 = vand.u32 %v515, 4294901760
    %517 = vmatmul.mubr.f32.gmra.mrb[0].mxu0 %v516
    %v518 = vpop.f32.mrb[0].mxu0
    %v519 = vadd.f32 %v430, %v518
    %v520 = vpop.f32.mrb[0].mxu0
    %521 = vdwg.mxu0
    %522 = vmatprep.subr.mxu0 0.0
    %v523 = vand.u32 %v40, 4294901760
    %v524 = vsub.f32 %v40, %v523
    %v525 = vand.u32 %v524, 4294901760
    %526 = vmatpush1.xpose.msra.mxu0 %v525
    %527 = vmatprep.subr.mxu0 0.0
    %v528 = vand.u32 %v43, 4294901760
    %v529 = vsub.f32 %v43, %v528
    %v530 = vand.u32 %v529, 4294901760
    %531 = vmatpush1.xpose.msra.mxu0 %v530
    %532 = vmatprep.subr.mxu0 0.0
    %v533 = vand.u32 %v46, 4294901760
    %v534 = vsub.f32 %v46, %v533
    %v535 = vand.u32 %v534, 4294901760
    %536 = vmatpush1.xpose.msra.mxu0 %v535
    %537 = vmatprep.subr.mxu0 0.0
    %v538 = vand.u32 %v49, 4294901760
    %v539 = vsub.f32 %v49, %v538
    %v540 = vand.u32 %v539, 4294901760
    %541 = vmatpush1.xpose.msra.mxu0 %v540
    %542 = vmatprep.subr.mxu0 0.0
    %v543 = vand.u32 %v52, 4294901760
    %v544 = vsub.f32 %v52, %v543
    %v545 = vand.u32 %v544, 4294901760
    %546 = vmatpush1.xpose.msra.mxu0 %v545
    %547 = vmatprep.subr.mxu0 0.0
    %v548 = vand.u32 %v55, 4294901760
    %v549 = vsub.f32 %v55, %v548
    %v550 = vand.u32 %v549, 4294901760
    %551 = vmatpush1.xpose.msra.mxu0 %v550
    %552 = vmatprep.subr.mxu0 0.0
    %v553 = vand.u32 %v58, 4294901760
    %v554 = vsub.f32 %v58, %v553
    %v555 = vand.u32 %v554, 4294901760
    %556 = vmatpush1.xpose.msra.mxu0 %v555
    %557 = vmatprep.subr.mxu0 0.0
    %v558 = vand.u32 %v61, 4294901760
    %v559 = vsub.f32 %v61, %v558
    %v560 = vand.u32 %v559, 4294901760
    %561 = vmatpush1.xpose.msra.mxu0 %v560
    %562 = vmatprep.subr.mxu0 0.0
    %v563 = vand.u32 %v64, 4294901760
    %v564 = vsub.f32 %v64, %v563
    %v565 = vand.u32 %v564, 4294901760
    %566 = vmatpush1.xpose.msra.mxu0 %v565
    %567 = vmatprep.subr.mxu0 0.0
    %v568 = vand.u32 %v67, 4294901760
    %v569 = vsub.f32 %v67, %v568
    %v570 = vand.u32 %v569, 4294901760
    %571 = vmatpush1.xpose.msra.mxu0 %v570
    %572 = vmatprep.subr.mxu0 0.0
    %v573 = vand.u32 %v70, 4294901760
    %v574 = vsub.f32 %v70, %v573
    %v575 = vand.u32 %v574, 4294901760
    %576 = vmatpush1.xpose.msra.mxu0 %v575
    %577 = vmatprep.subr.mxu0 0.0
    %v578 = vand.u32 %v73, 4294901760
    %v579 = vsub.f32 %v73, %v578
    %v580 = vand.u32 %v579, 4294901760
    %581 = vmatpush1.xpose.msra.mxu0 %v580
    %582 = vmatprep.subr.mxu0 0.0
    %v583 = vand.u32 %v76, 4294901760
    %v584 = vsub.f32 %v76, %v583
    %v585 = vand.u32 %v584, 4294901760
    %586 = vmatpush1.xpose.msra.mxu0 %v585
    %587 = vmatprep.subr.mxu0 0.0
    %v588 = vand.u32 %v79, 4294901760
    %v589 = vsub.f32 %v79, %v588
    %v590 = vand.u32 %v589, 4294901760
    %591 = vmatpush1.xpose.msra.mxu0 %v590
    %592 = vmatprep.subr.mxu0 0.0
    %v593 = vand.u32 %v82, 4294901760
    %v594 = vsub.f32 %v82, %v593
    %v595 = vand.u32 %v594, 4294901760
    %596 = vmatpush1.xpose.msra.mxu0 %v595
    %597 = vmatprep.subr.mxu0 0.0
    %v598 = vand.u32 %v85, 4294901760
    %v599 = vsub.f32 %v85, %v598
    %v600 = vand.u32 %v599, 4294901760
    %601 = vmatpush1.xpose.msra.mxu0 %v600
    %602 = vmatprep.subr.mxu0 0.0
    %603 = vmatpush1.xpose.msra.mxu0 0.0
    %604 = vmatprep.subr.mxu0 0.0
    %605 = vmatpush1.xpose.msra.mxu0 0.0
    %606 = vmatprep.subr.mxu0 0.0
    %607 = vmatpush1.xpose.msra.mxu0 0.0
    %608 = vmatprep.subr.mxu0 0.0
    %609 = vmatpush1.xpose.msra.mxu0 0.0
    %610 = vmatprep.subr.mxu0 0.0
    %611 = vmatpush1.xpose.msra.mxu0 0.0
    %612 = vmatprep.subr.mxu0 0.0
    %613 = vmatpush1.xpose.msra.mxu0 0.0
    %614 = vmatprep.subr.mxu0 0.0
    %615 = vmatpush1.xpose.msra.mxu0 0.0
    %616 = vmatprep.subr.mxu0 0.0
    %617 = vmatpush1.xpose.msra.mxu0 0.0
    %618 = vmatprep.subr.mxu0 0.0
    %619 = vmatpush1.xpose.msra.mxu0 0.0
    %620 = vmatprep.subr.mxu0 0.0
    %621 = vmatpush1.xpose.msra.mxu0 0.0
    %622 = vmatprep.subr.mxu0 0.0
    %623 = vmatpush1.xpose.msra.mxu0 0.0
    %624 = vmatprep.subr.mxu0 0.0
    %625 = vmatpush1.xpose.msra.mxu0 0.0
    %626 = vmatprep.subr.mxu0 0.0
    %627 = vmatpush1.xpose.msra.mxu0 0.0
    %628 = vmatprep.subr.mxu0 0.0
    %629 = vmatpush1.xpose.msra.mxu0 0.0
    %630 = vmatprep.subr.mxu0 0.0
    %631 = vmatpush1.xpose.msra.mxu0 0.0
    %632 = vmatprep.subr.mxu0 0.0
    %633 = vmatpush1.xpose.msra.mxu0 0.0
    %634 = vmatprep.mubr.f32.mxu0 0.0
    %v635 = vand.u32 %v37, 4294901760
    %636 = vmatmul.mubr.f32.gmra.mrb[0].mxu0 %v635
    %v637 = vpop.f32.mrb[0].mxu0
    %v638 = vadd.f32 %v519, %v637
    %v639 = vpop.f32.mrb[0].mxu0
    %640 = vdwg.mxu0
    %641 = vmatprep.subr.mxu0 0.0
    %v642 = vand.u32 %v40, 4294901760
    %643 = vmatpush1.xpose.msra.mxu0 %v642
    %644 = vmatprep.subr.mxu0 0.0
    %v645 = vand.u32 %v43, 4294901760
    %646 = vmatpush1.xpose.msra.mxu0 %v645
    %647 = vmatprep.subr.mxu0 0.0
    %v648 = vand.u32 %v46, 4294901760
    %649 = vmatpush1.xpose.msra.mxu0 %v648
    %650 = vmatprep.subr.mxu0 0.0
    %v651 = vand.u32 %v49, 4294901760
    %652 = vmatpush1.xpose.msra.mxu0 %v651
    %653 = vmatprep.subr.mxu0 0.0
    %v654 = vand.u32 %v52, 4294901760
    %655 = vmatpush1.xpose.msra.mxu0 %v654
    %656 = vmatprep.subr.mxu0 0.0
    %v657 = vand.u32 %v55, 4294901760
    %658 = vmatpush1.xpose.msra.mxu0 %v657
    %659 = vmatprep.subr.mxu0 0.0
    %v660 = vand.u32 %v58, 4294901760
    %661 = vmatpush1.xpose.msra.mxu0 %v660
    %662 = vmatprep.subr.mxu0 0.0
    %v663 = vand.u32 %v61, 4294901760
    %664 = vmatpush1.xpose.msra.mxu0 %v663
    %665 = vmatprep.subr.mxu0 0.0
    %v666 = vand.u32 %v64, 4294901760
    %667 = vmatpush1.xpose.msra.mxu0 %v666
    %668 = vmatprep.subr.mxu0 0.0
    %v669 = vand.u32 %v67, 4294901760
    %670 = vmatpush1.xpose.msra.mxu0 %v669
    %671 = vmatprep.subr.mxu0 0.0
    %v672 = vand.u32 %v70, 4294901760
    %673 = vmatpush1.xpose.msra.mxu0 %v672
    %674 = vmatprep.subr.mxu0 0.0
    %v675 = vand.u32 %v73, 4294901760
    %676 = vmatpush1.xpose.msra.mxu0 %v675
    %677 = vmatprep.subr.mxu0 0.0
    %v678 = vand.u32 %v76, 4294901760
    %679 = vmatpush1.xpose.msra.mxu0 %v678
    %680 = vmatprep.subr.mxu0 0.0
    %v681 = vand.u32 %v79, 4294901760
    %682 = vmatpush1.xpose.msra.mxu0 %v681
    %683 = vmatprep.subr.mxu0 0.0
    %v684 = vand.u32 %v82, 4294901760
    %685 = vmatpush1.xpose.msra.mxu0 %v684
    %686 = vmatprep.subr.mxu0 0.0
    %v687 = vand.u32 %v85, 4294901760
    %688 = vmatpush1.xpose.msra.mxu0 %v687
    %689 = vmatprep.subr.mxu0 0.0
    %690 = vmatpush1.xpose.msra.mxu0 0.0
    %691 = vmatprep.subr.mxu0 0.0
    %692 = vmatpush1.xpose.msra.mxu0 0.0
    %693 = vmatprep.subr.mxu0 0.0
    %694 = vmatpush1.xpose.msra.mxu0 0.0
    %695 = vmatprep.subr.mxu0 0.0
    %696 = vmatpush1.xpose.msra.mxu0 0.0
    %697 = vmatprep.subr.mxu0 0.0
    %698 = vmatpush1.xpose.msra.mxu0 0.0
    %699 = vmatprep.subr.mxu0 0.0
    %700 = vmatpush1.xpose.msra.mxu0 0.0
    %701 = vmatprep.subr.mxu0 0.0
    %702 = vmatpush1.xpose.msra.mxu0 0.0
    %703 = vmatprep.subr.mxu0 0.0
    %704 = vmatpush1.xpose.msra.mxu0 0.0
    %705 = vmatprep.subr.mxu0 0.0
    %706 = vmatpush1.xpose.msra.mxu0 0.0
    %707 = vmatprep.subr.mxu0 0.0
    %708 = vmatpush1.xpose.msra.mxu0 0.0
    %709 = vmatprep.subr.mxu0 0.0
    %710 = vmatpush1.xpose.msra.mxu0 0.0
    %711 = vmatprep.subr.mxu0 0.0
    %712 = vmatpush1.xpose.msra.mxu0 0.0
    %713 = vmatprep.subr.mxu0 0.0
    %714 = vmatpush1.xpose.msra.mxu0 0.0
    %715 = vmatprep.subr.mxu0 0.0
    %716 = vmatpush1.xpose.msra.mxu0 0.0
    %717 = vmatprep.subr.mxu0 0.0
    %718 = vmatpush1.xpose.msra.mxu0 0.0
    %719 = vmatprep.subr.mxu0 0.0
    %720 = vmatpush1.xpose.msra.mxu0 0.0
    %721 = vmatprep.mubr.f32.mxu0 0.0
    %v722 = vand.u32 %v37, 4294901760
    %723 = vmatmul.mubr.f32.gmra.mrb[0].mxu0 %v722
    %v724 = vpop.f32.mrb[0].mxu0
    %v725 = vadd.f32 %v638, %v724
    %v726 = vpop.f32.mrb[0].mxu0
    %727 = vdwg.mxu0
    %v728 = vxor.u32 %v725, 2147483648
    %v729 = vmul.f32 %v728, 1.442695
    %v730 = vpow.pop %v729
    %v731 = vadd.f32 %v730, 1.0
    %v732 = vrcp.pop %v731
    %v733 = vmul.f32 1.0, %v732
    %734 = vst [vmem:[#allocation3] sm:$0x1] %v733
    // Predicated region
    $region14: #{tpu_custom_call.1} parent=1 // pred_check
      _
    $region15: #{tpu_custom_call.1} parent=1 // pred_check_branch
      %736 = sbr.rel (0) target = $region17
    $region16: #{tpu_custom_call.1} parent=1 // pred_region
      %s738 = ssub.s32 16, 16
      %739 = vsyncadd [#allocation4], %s738
      %s741 = sshll.u32 [#allocation3], 4
      %s742 = int_to_ptr.vmem [resolvable:$true] %s741
      %744 = dma.vmem_to_hbm [thread:$0]  %s742, 16, %s3, [#allocation4]
    $region17: #{tpu_custom_call.1} parent=1 // pred_fallthru
      _
    // Predicated region
    $region18: #{tpu_custom_call.1} parent=1 // pred_check
      _
    $region19: #{tpu_custom_call.1} parent=1 // pred_check_branch
      %746 = sbr.rel (0) target = $region21
    $region20: #{tpu_custom_call.1} parent=1 // pred_region
      %747 = dma.done [#allocation4], 16
    $region21: #{tpu_custom_call.1} parent=1 // pred_fallthru
      _
    %748 = vsyncpa [#allocation4], 1

</llo_original>
